<compile_context>
chip_gen: v6e
topology: v6e:2x2x1
jax: 0.10.0
libtpu: 0.0.40
codegen_flags: <defaults>
</compile_context>

<pallas_src>
import math

import jax
import jax.numpy as jnp
from jax.experimental import pallas as pl
from jax.experimental.pallas import tpu as pltpu

_LANES = 128


def _round_up(x, m):
    return ((x + m - 1) // m) * m


def pack_params(params):
    """Pack w1,b1,...,w4,b4 into one (rows, 128) f32 slab (single DMA).

    Each segment is row-padded to a multiple of 8 (f32 sublane) and
    lane-padded to 128 with zeros. Returns (packed, seg_info) where seg_info
    holds the static (row_offset, rows, cols) of every segment for in-kernel
    static slicing.
    """
    flat = []
    for (w, b) in params:
        flat += [w, b]
    segs, info, row = [], [], 0
    for a in flat:
        r, c = a.shape
        rp = _round_up(r, 8)
        segs.append(jnp.pad(a.astype(jnp.float32),
                            ((0, rp - r), (0, _LANES - c))))
        info.append((row, r, c))
        row += rp
    return jnp.concatenate(segs, axis=0), tuple(info)


def _make_actor_kernel(seg_info, n_actions):
    """seg_info: static (row_offset, rows, cols) for w1,b1,w2,b2,w3,b3,w4,b4."""
    (sw1, sb1, sw2, sb2, sw3, sb3, sw4, sb4) = seg_info

    def seg(p_ref, s):
        r0, r, c = s                       # Python ints -> static slice
        return p_ref[r0:r0 + r, 0:c]

    def seg_full(p_ref, s):
        r0, r, _ = s                       # all 128 lanes (zero padded)
        return p_ref[r0:r0 + r, :]

    def kernel(x_ref, p_ref, o_ref):
        x = x_ref[...]
        h = jnp.tanh(jnp.dot(x, seg(p_ref, sw1),
                             preferred_element_type=jnp.float32) + seg(p_ref, sb1))
        h = jnp.tanh(jnp.dot(h, seg(p_ref, sw2),
                             preferred_element_type=jnp.float32) + seg(p_ref, sb2))
        h = jnp.tanh(jnp.dot(h, seg(p_ref, sw3),
                             preferred_element_type=jnp.float32) + seg(p_ref, sb3))

        # Final layer over the full 128-lane padded weight/bias so the output
        # tile is lane-dense (unmasked vst).  Padded lanes get logit 0 (zero
        # weights/bias); mask them to a huge negative so exp() -> 0 exactly.
        logits = (jnp.dot(h, seg_full(p_ref, sw4),
                          preferred_element_type=jnp.float32)
                  + seg_full(p_ref, sb4))
        lane = jax.lax.broadcasted_iota(jnp.int32, logits.shape, 1)
        logits = jnp.where(lane < n_actions, logits, -1e30)

        # Numerically-stable softmax; approximate reciprocal runs on the EUP
        # slot so the divide is essentially free.
        m = jnp.max(logits, axis=-1, keepdims=True)
        e = jnp.exp(logits - m)
        o_ref[...] = e * pl.reciprocal(jnp.sum(e, axis=-1, keepdims=True),
                                       approx=True)

    return kernel


def actor_net_forward(state, packed, seg_info, n_actions, *, block_batch=512):
    """One pallas_call; 1-D grid over batch, packed params VMEM-resident."""
    B, n_states = state.shape
    TB = min(block_batch, _round_up(B, 8))      # batch tile, multiple of 8
    B_pad = _round_up(B, TB)
    if B_pad != B:
        state = jnp.pad(state, ((0, B_pad - B), (0, 0)))
    rows, lanes = packed.shape

    out = pl.pallas_call(
        _make_actor_kernel(seg_info, n_actions),
        out_shape=jax.ShapeDtypeStruct((B_pad, _LANES), jnp.float32),
        grid_spec=pltpu.PrefetchScalarGridSpec(
            num_scalar_prefetch=0,
            grid=(B_pad // TB,),
            in_specs=[
                pl.BlockSpec((TB, n_states), lambda i: (i, 0)),   # batch tile
                pl.BlockSpec((rows, lanes), lambda i: (0, 0)),    # resident params
            ],
            out_specs=pl.BlockSpec((TB, _LANES), lambda i: (i, 0)),  # lane-dense
        ),
        compiler_params=pltpu.CompilerParams(
            dimension_semantics=("parallel",)),    # 2-TC sharding on v7x
    )(state, packed)
    return out[:B, :n_actions]


def init_linear(key, fan_in, fan_out):
    """Deterministic init mimicking PyTorch's default uniform(-1/sqrt(fan_in), +)."""
    kw, kb = jax.random.split(key)
    bound = 1.0 / math.sqrt(fan_in)
    # stored as (in, out) so the kernel does x @ W
    w = jax.random.uniform(kw, (fan_in, fan_out), jnp.float32, -bound, bound)
    b = jax.random.uniform(kb, (1, fan_out), jnp.float32, -bound, bound)
    return w, b


def init_actor_params(key, n_states, n_actions):
    k1, k2, k3, k4 = jax.random.split(key, 4)
    return (
        init_linear(k1, n_states, 16),
        init_linear(k2, 16, 32),
        init_linear(k3, 32, 16),
        init_linear(k4, 16, n_actions),
    )


def actor_net_ref(state, params):
    """Pure-JAX reference for verification."""
    (w1, b1), (w2, b2), (w3, b3), (w4, b4) = params
    h = jnp.tanh(state @ w1 + b1)
    h = jnp.tanh(h @ w2 + b2)
    h = jnp.tanh(h @ w3 + b3)
    return jax.nn.softmax(h @ w4 + b4, axis=-1)


if __name__ == "__main__":
    # CartPole: n_states=4, n_actions=2.
    n_states, n_actions = 4, 2

    key = jax.random.PRNGKey(0)
    k_params, k_small, k_big, k_one = jax.random.split(key, 4)

    params = init_actor_params(k_params, n_states, n_actions)
    packed, seg_info = pack_params(params)          # one (104, 128) f32 slab

    # Small batch (single grid step).
    state_small = jax.random.normal(k_small, (8, n_states), jnp.float32)
    out = jax.block_until_ready(
        actor_net_forward(state_small, packed, seg_info, n_actions))
    ref = actor_net_ref(state_small, params)
    assert out.shape == (8, n_actions)
    assert jnp.allclose(jnp.sum(out, axis=-1), 1.0, atol=5e-3)
    assert jnp.allclose(out, ref, atol=5e-3, rtol=5e-3)

    # Single-env step (B=1): exercises batch row-padding to the 8-sublane tile.
    state_one = jax.random.normal(k_one, (1, n_states), jnp.float32)
    out_one = jax.block_until_ready(
        actor_net_forward(state_one, packed, seg_info, n_actions))
    ref_one = actor_net_ref(state_one, params)
    assert out_one.shape == (1, n_actions)
    assert jnp.allclose(out_one, ref_one, atol=5e-3, rtol=5e-3)

    # Larger "vectorized envs" batch: exercises the batch grid (2 steps of
    # 512 rows) with the packed params staying VMEM-resident across steps.
    state_big = jax.random.normal(k_big, (1000, n_states), jnp.float32)
    out_big = jax.block_until_ready(
        actor_net_forward(state_big, packed, seg_info, n_actions))
    ref_big = actor_net_ref(state_big, params)
    assert out_big.shape == (1000, n_actions)
    assert jnp.allclose(out_big, ref_big, atol=5e-3, rtol=5e-3)

    print("KERNEL_OK")
</pallas_src>

<mosaic_0001>
module attributes {stable_mosaic.version = 11 : i64} {
  func.func @kernel(%arg0: i32, %arg1: memref<8x4xf32, #tpu.memory_space<vmem>>, %arg2: memref<104x128xf32, #tpu.memory_space<vmem>>, %arg3: memref<8x128xf32, #tpu.memory_space<vmem>>) attributes {dimension_semantics = [#tpu.dimension_semantics<parallel>], iteration_bounds = array<i64: 1>, scalar_prefetch = 0 : i64, scratch_operands = 0 : i64, tpu.core_type = #tpu.core_type<tc>, window_params = [{transform_indices = @transform_0, window_bounds = array<i64: 8, 4>}, {pipeline_mode = #tpu.pipeline_mode<synchronous>, transform_indices = @transform_1, window_bounds = array<i64: 104, 128>}, {transform_indices = @transform_2, window_bounds = array<i64: 8, 128>}]} {
    %c0 = arith.constant 0 : index
    %c0_0 = arith.constant 0 : index
    %0 = vector.load %arg1[%c0, %c0_0] : memref<8x4xf32, #tpu.memory_space<vmem>>, vector<8x4xf32>
    %c0_1 = arith.constant 0 : index
    %c0_2 = arith.constant 0 : index
    %1 = vector.load %arg2[%c0_1, %c0_2] : memref<104x128xf32, #tpu.memory_space<vmem>>, vector<4x16xf32>
    %cst = arith.constant dense<0.000000e+00> : vector<8x16xf32>
    %2 = tpu.matmul %0, %1, %cst {dimension_numbers = #tpu.dot_dimension_numbers<[1], [0], [0], [1], [0, 0, 1, 1], [], []>} : vector<8x4xf32>, vector<4x16xf32>, vector<8x16xf32> -> vector<8x16xf32>
    %c8 = arith.constant 8 : index
    %c0_3 = arith.constant 0 : index
    %3 = vector.load %arg2[%c8, %c0_3] : memref<104x128xf32, #tpu.memory_space<vmem>>, vector<1x16xf32>
    %4 = vector.broadcast %3 : vector<1x16xf32> to vector<8x16xf32>
    %5 = arith.addf %2, %4 : vector<8x16xf32>
    %6 = math.tanh %5 : vector<8x16xf32>
    %c16 = arith.constant 16 : index
    %c0_4 = arith.constant 0 : index
    %7 = vector.load %arg2[%c16, %c0_4] : memref<104x128xf32, #tpu.memory_space<vmem>>, vector<16x32xf32>
    %cst_5 = arith.constant dense<0.000000e+00> : vector<8x32xf32>
    %8 = tpu.matmul %6, %7, %cst_5 {dimension_numbers = #tpu.dot_dimension_numbers<[1], [0], [0], [1], [0, 0, 1, 1], [], []>} : vector<8x16xf32>, vector<16x32xf32>, vector<8x32xf32> -> vector<8x32xf32>
    %c32 = arith.constant 32 : index
    %c0_6 = arith.constant 0 : index
    %9 = vector.load %arg2[%c32, %c0_6] : memref<104x128xf32, #tpu.memory_space<vmem>>, vector<1x32xf32>
    %10 = vector.broadcast %9 : vector<1x32xf32> to vector<8x32xf32>
    %11 = arith.addf %8, %10 : vector<8x32xf32>
    %12 = math.tanh %11 : vector<8x32xf32>
    %c40 = arith.constant 40 : index
    %c0_7 = arith.constant 0 : index
    %13 = vector.load %arg2[%c40, %c0_7] : memref<104x128xf32, #tpu.memory_space<vmem>>, vector<32x16xf32>
    %cst_8 = arith.constant dense<0.000000e+00> : vector<8x16xf32>
    %14 = tpu.matmul %12, %13, %cst_8 {dimension_numbers = #tpu.dot_dimension_numbers<[1], [0], [0], [1], [0, 0, 1, 1], [], []>} : vector<8x32xf32>, vector<32x16xf32>, vector<8x16xf32> -> vector<8x16xf32>
    %c72 = arith.constant 72 : index
    %c0_9 = arith.constant 0 : index
    %15 = vector.load %arg2[%c72, %c0_9] : memref<104x128xf32, #tpu.memory_space<vmem>>, vector<1x16xf32>
    %16 = vector.broadcast %15 : vector<1x16xf32> to vector<8x16xf32>
    %17 = arith.addf %14, %16 : vector<8x16xf32>
    %18 = math.tanh %17 : vector<8x16xf32>
    %c80 = arith.constant 80 : index
    %c0_10 = arith.constant 0 : index
    %19 = vector.load %arg2[%c80, %c0_10] : memref<104x128xf32, #tpu.memory_space<vmem>>, vector<16x128xf32>
    %cst_11 = arith.constant dense<0.000000e+00> : vector<8x128xf32>
    %20 = tpu.matmul %18, %19, %cst_11 {dimension_numbers = #tpu.dot_dimension_numbers<[1], [0], [0], [1], [0, 0, 1, 1], [], []>} : vector<8x16xf32>, vector<16x128xf32>, vector<8x128xf32> -> vector<8x128xf32>
    %c96 = arith.constant 96 : index
    %c0_12 = arith.constant 0 : index
    %21 = vector.load %arg2[%c96, %c0_12] : memref<104x128xf32, #tpu.memory_space<vmem>>, vector<1x128xf32>
    %22 = vector.broadcast %21 : vector<1x128xf32> to vector<8x128xf32>
    %23 = arith.addf %20, %22 : vector<8x128xf32>
    %24 = tpu.iota {dimensions = array<i32: 1>} : vector<8x128xi32>
    %c2_i32 = arith.constant 2 : i32
    %25 = vector.broadcast %c2_i32 : i32 to vector<8x128xi32>
    %26 = arith.cmpi slt, %24, %25 : vector<8x128xi32>
    %cst_13 = arith.constant -1.000000e+30 : f32
    %27 = vector.broadcast %cst_13 : f32 to vector<8x128xf32>
    %28 = arith.select %26, %23, %27 : vector<8x128xi1>, vector<8x128xf32>
    %cst_14 = arith.constant dense<0xFF800000> : vector<8xf32>
    %29 = vector.multi_reduction <maximumf>, %28, %cst_14 [1] : vector<8x128xf32> to vector<8xf32>
    %30 = vector.shape_cast %29 : vector<8xf32> to vector<8x1xf32>
    %31 = vector.broadcast %30 : vector<8x1xf32> to vector<8x128xf32>
    %32 = arith.subf %28, %31 : vector<8x128xf32>
    %33 = math.exp %32 : vector<8x128xf32>
    %cst_15 = arith.constant dense<0.000000e+00> : vector<8xf32>
    %34 = vector.multi_reduction <add>, %33, %cst_15 [1] : vector<8x128xf32> to vector<8xf32>
    %35 = vector.shape_cast %34 : vector<8xf32> to vector<8x1xf32>
    %36 = tpu.reciprocal %35 {approx = true} : vector<8x1xf32> -> vector<8x1xf32>
    %37 = vector.broadcast %36 : vector<8x1xf32> to vector<8x128xf32>
    %38 = arith.mulf %33, %37 : vector<8x128xf32>
    %c0_16 = arith.constant 0 : index
    %c0_17 = arith.constant 0 : index
    %39 = vector.load %arg3[%c0_16, %c0_17] : memref<8x128xf32, #tpu.memory_space<vmem>>, vector<8x128xf32>
    tpu.vector_store %arg3[%c0_16, %c0_17], %38 {strides = array<i32>} : memref<8x128xf32, #tpu.memory_space<vmem>>, vector<8x128xf32>,
    return
  }
  func.func @transform_0(%arg0: i32) -> (i32, i32) {
    %c0_i32 = arith.constant 0 : i32
    %c0_i32_0 = arith.constant 0 : i32
    return %arg0, %c0_i32 : i32, i32
  }
  func.func @transform_1(%arg0: i32) -> (i32, i32) {
    %c0_i32 = arith.constant 0 : i32
    %c0_i32_0 = arith.constant 0 : i32
    %c0_i32_1 = arith.constant 0 : i32
    return %c0_i32, %c0_i32_0 : i32, i32
  }
  func.func @transform_2(%arg0: i32) -> (i32, i32) {
    %c0_i32 = arith.constant 0 : i32
    %c0_i32_0 = arith.constant 0 : i32
    return %arg0, %c0_i32 : i32, i32
  }
}

</mosaic_0001>

<llo_original>
// kernel: tpu_custom_call.1
$region0: #{tpu_custom_call.1}
  #allocation0 [shape = 'u32[]', space=smem, size = 0x4, offset = 0x4, fixed_abs, tag = 'smem constant byte address 0x4 - core index']
  #allocation1 [shape = 'u32[144,128]{1,0:T(1,128)}', space=vmem, size = 0x12000, scoped, tag = 'internal scratch']
  %s0 = inlined_call_operand.vmem [shape: f32[8,4], index: 0, kind: input, shape index: {}]
  %s1 = inlined_call_operand.hbm [shape: f32[104,128], index: 1, kind: input, shape index: {}]
  %s2 = inlined_call_operand.hbm [shape: f32[8,128], index: 2, kind: output, shape index: {}]
  %s3 = sld [smem:[#allocation0]]
  $region22: #{tpu_custom_call.1} parent=0
    _
  %s5 = ssub.s32 1, %s3
  %s6 = scalar_select 0, %s5, %s3
  $region1: #{tpu_custom_call.1} parent=0
    #allocation2 [shape = 'u8[53248]{0}', space=vmem, size = 0xd000, scoped, tag = 'input window, operand 1, single buffered']
    #allocation3 [shape = 's32[1]{0}', space=sflag, size = 0x4, scoped, tag = 'scoped memory for tpu_custom_call.1']
    #allocation4 [shape = 's32[1]{0}', space=sflag, size = 0x4, scoped, tag = 'scoped memory for tpu_custom_call.1']
    #allocation5 [shape = 'u8[4096]{0}', space=vmem, size = 0x1000, scoped, tag = 'output window, operand 0, single buffered']
    %7 = vsyncpa [#allocation3], 0
    %8 = vsyncpa [#allocation4], 0
    // Predicated region
    $region2: #{tpu_custom_call.1} parent=1 // pred_check
      _
    $region3: #{tpu_custom_call.1} parent=1 // pred_check_branch
      %10 = sbr.rel (0) target = $region5
    $region4: #{tpu_custom_call.1} parent=1 // pred_region
      _
    $region5: #{tpu_custom_call.1} parent=1 // pred_fallthru
      _
    // Predicated region
    $region6: #{tpu_custom_call.1} parent=1 // pred_check
      _
    $region7: #{tpu_custom_call.1} parent=1 // pred_check_branch
      %12 = sbr.rel (0) target = $region9
    $region8: #{tpu_custom_call.1} parent=1 // pred_region
      %s14 = ssub.s32 1664, 1664
      %15 = vsyncadd [#allocation3], %s14
      %s16 = sshll.u32 [#allocation2], 4
      %s17 = int_to_ptr.vmem [resolvable:$true] %s16
      %22 = dma.hbm_to_vmem [thread:$0]  %s1, 1664, %s17, [#allocation3], 128, 128, 8
    $region9: #{tpu_custom_call.1} parent=1 // pred_fallthru
      _
    // Predicated region
    $region10: #{tpu_custom_call.1} parent=1 // pred_check
      _
    $region11: #{tpu_custom_call.1} parent=1 // pred_check_branch
      %24 = sbr.rel (0) target = $region13
    $region12: #{tpu_custom_call.1} parent=1 // pred_region
      %25 = dma.done [#allocation3], 1664
    $region13: #{tpu_custom_call.1} parent=1 // pred_fallthru
      _
    %v26 = vld [vmem:[%s0] sm:$0xff]
    %v27 = vld [vmem:[#allocation2] sm:$0xf]
    %v28 = vld [vmem:[#allocation2 + $0x8] sm:$0x1]
    %v29 = vlaneseq
    %v30 = vshrl.u32 %v29, 7
    %v31 = vsub.s32 0, %v30
    %v32 = vrot.slane %v28, %v31
    %vm33 = vcmask 31744
    %v35 = vsel %vm33, %v26, 0
    %vm37 = vcmask 1043456
    %v39 = vsel %vm37, %v27, 0
    %41 = vmatprep.subr.mxu0 0.0
    %42 = vmatpush1.msra.mxu0 0.0
    %43 = vmatprep.subr.mxu0 0.0
    %44 = vmatpush1.msra.mxu0 0.0
    %45 = vmatprep.subr.mxu0 0.0
    %46 = vmatpush1.msra.mxu0 0.0
    %47 = vmatprep.subr.mxu0 0.0
    %48 = vmatpush1.msra.mxu0 0.0
    %49 = vmatprep.subr.mxu0 0.0
    %50 = vmatpush1.msra.mxu0 0.0
    %51 = vmatprep.subr.mxu0 0.0
    %52 = vmatpush1.msra.mxu0 0.0
    %53 = vmatprep.subr.mxu0 0.0
    %54 = vmatpush1.msra.mxu0 0.0
    %55 = vmatprep.subr.mxu0 0.0
    %56 = vmatpush1.msra.mxu0 0.0
    %57 = vmatprep.subr.mxu0 0.0
    %58 = vmatpush1.msra.mxu0 0.0
    %59 = vmatprep.subr.mxu0 0.0
    %60 = vmatpush1.msra.mxu0 0.0
    %61 = vmatprep.subr.mxu0 0.0
    %62 = vmatpush1.msra.mxu0 0.0
    %63 = vmatprep.subr.mxu0 0.0
    %64 = vmatpush1.msra.mxu0 0.0
    %65 = vmatprep.subr.mxu0 0.0
    %66 = vmatpush1.msra.mxu0 0.0
    %67 = vmatprep.subr.mxu0 0.0
    %68 = vmatpush1.msra.mxu0 0.0
    %69 = vmatprep.subr.mxu0 0.0
    %70 = vmatpush1.msra.mxu0 0.0
    %71 = vmatprep.subr.mxu0 0.0
    %72 = vmatpush1.msra.mxu0 %v39
    %73 = vmatprep.subr.mxu0 0.0
    %74 = vmatpush2.msra.mxu0 0.0
    %75 = vmatprep.subr.mxu0 0.0
    %76 = vmatpush2.msra.mxu0 0.0
    %77 = vmatprep.subr.mxu0 0.0
    %78 = vmatpush2.msra.mxu0 0.0
    %79 = vmatprep.subr.mxu0 0.0
    %80 = vmatpush2.msra.mxu0 0.0
    %81 = vmatprep.subr.mxu0 0.0
    %82 = vmatpush2.msra.mxu0 0.0
    %83 = vmatprep.subr.mxu0 0.0
    %84 = vmatpush2.msra.mxu0 0.0
    %85 = vmatprep.subr.mxu0 0.0
    %86 = vmatpush2.msra.mxu0 0.0
    %87 = vmatprep.subr.mxu0 0.0
    %88 = vmatpush2.msra.mxu0 0.0
    %89 = vmatprep.subr.mxu0 0.0
    %90 = vmatpush2.msra.mxu0 0.0
    %91 = vmatprep.subr.mxu0 0.0
    %92 = vmatpush2.msra.mxu0 0.0
    %93 = vmatprep.subr.mxu0 0.0
    %94 = vmatpush2.msra.mxu0 0.0
    %95 = vmatprep.subr.mxu0 0.0
    %96 = vmatpush2.msra.mxu0 0.0
    %97 = vmatprep.subr.mxu0 0.0
    %98 = vmatpush2.msra.mxu0 0.0
    %99 = vmatprep.subr.mxu0 0.0
    %100 = vmatpush2.msra.mxu0 0.0
    %101 = vmatprep.subr.mxu0 0.0
    %102 = vmatpush2.msra.mxu0 0.0
    %103 = vmatprep.subr.mxu0 0.0
    %104 = vmatpush2.msra.mxu0 0.0
    %105 = vmatprep.mubr.f32.mxu0 0.0
    %106 = vmatmul.mubr.f32.gmra.mxu0 %v35
    %v107 = vpop.f32.mrf.mxu0
    %v108 = vadd.f32 %v32, %v107
    %v109 = vpop.f32.mrf.mxu0
    %110 = vdwg.mxu0
    %v111 = vtanh.pop %v108
    %v112 = vld [vmem:[#allocation2 + $0x10] sm:$0xff]
    %v113 = vld [vmem:[#allocation2 + $0x18] sm:$0xff]
    %v114 = vld [vmem:[#allocation2 + $0x20] sm:$0x1]
    %v115 = vlaneseq
    %v116 = vshrl.u32 %v115, 7
    %v117 = vsub.s32 0, %v116
    %v118 = vrot.slane %v114, %v117
    %vm119 = vcmask 130048
    %v121 = vsel %vm119, %v111, 0
    %123 = vmatprep.subr.mxu0 0.0
    %124 = vmatpush1.msra.mxu0 0.0
    %125 = vmatprep.subr.mxu0 0.0
    %126 = vmatpush1.msra.mxu0 0.0
    %127 = vmatprep.subr.mxu0 0.0
    %128 = vmatpush1.msra.mxu0 0.0
    %129 = vmatprep.subr.mxu0 0.0
    %130 = vmatpush1.msra.mxu0 0.0
    %131 = vmatprep.subr.mxu0 0.0
    %132 = vmatpush1.msra.mxu0 0.0
    %133 = vmatprep.subr.mxu0 0.0
    %134 = vmatpush1.msra.mxu0 0.0
    %135 = vmatprep.subr.mxu0 0.0
    %136 = vmatpush1.msra.mxu0 0.0
    %137 = vmatprep.subr.mxu0 0.0
    %138 = vmatpush1.msra.mxu0 0.0
    %139 = vmatprep.subr.mxu0 0.0
    %140 = vmatpush1.msra.mxu0 0.0
    %141 = vmatprep.subr.mxu0 0.0
    %142 = vmatpush1.msra.mxu0 0.0
    %143 = vmatprep.subr.mxu0 0.0
    %144 = vmatpush1.msra.mxu0 0.0
    %145 = vmatprep.subr.mxu0 0.0
    %146 = vmatpush1.msra.mxu0 0.0
    %147 = vmatprep.subr.mxu0 0.0
    %148 = vmatpush1.msra.mxu0 0.0
    %149 = vmatprep.subr.mxu0 0.0
    %150 = vmatpush1.msra.mxu0 0.0
    %151 = vmatprep.subr.mxu0 0.0
    %152 = vmatpush1.msra.mxu0 %v113
    %153 = vmatprep.subr.mxu0 0.0
    %154 = vmatpush1.msra.mxu0 %v112
    %155 = vmatprep.subr.mxu0 0.0
    %156 = vmatpush2.msra.mxu0 0.0
    %157 = vmatprep.subr.mxu0 0.0
    %158 = vmatpush2.msra.mxu0 0.0
    %159 = vmatprep.subr.mxu0 0.0
    %160 = vmatpush2.msra.mxu0 0.0
    %161 = vmatprep.subr.mxu0 0.0
    %162 = vmatpush2.msra.mxu0 0.0
    %163 = vmatprep.subr.mxu0 0.0
    %164 = vmatpush2.msra.mxu0 0.0
    %165 = vmatprep.subr.mxu0 0.0
    %166 = vmatpush2.msra.mxu0 0.0
    %167 = vmatprep.subr.mxu0 0.0
    %168 = vmatpush2.msra.mxu0 0.0
    %169 = vmatprep.subr.mxu0 0.0
    %170 = vmatpush2.msra.mxu0 0.0
    %171 = vmatprep.subr.mxu0 0.0
    %172 = vmatpush2.msra.mxu0 0.0
    %173 = vmatprep.subr.mxu0 0.0
    %174 = vmatpush2.msra.mxu0 0.0
    %175 = vmatprep.subr.mxu0 0.0
    %176 = vmatpush2.msra.mxu0 0.0
    %177 = vmatprep.subr.mxu0 0.0
    %178 = vmatpush2.msra.mxu0 0.0
    %179 = vmatprep.subr.mxu0 0.0
    %180 = vmatpush2.msra.mxu0 0.0
    %181 = vmatprep.subr.mxu0 0.0
    %182 = vmatpush2.msra.mxu0 0.0
    %183 = vmatprep.subr.mxu0 0.0
    %184 = vmatpush2.msra.mxu0 0.0
    %185 = vmatprep.subr.mxu0 0.0
    %186 = vmatpush2.msra.mxu0 0.0
    %187 = vmatprep.mubr.f32.mxu0 0.0
    %188 = vmatmul.mubr.f32.gmra.mxu0 %v121
    %v189 = vpop.f32.mrf.mxu0
    %v190 = vadd.f32 %v118, %v189
    %v191 = vpop.f32.mrf.mxu0
    %192 = vdwg.mxu0
    %v193 = vtanh.pop %v190
    %v194 = vld [vmem:[#allocation2 + $0x28] sm:$0xff]
    %v195 = vld [vmem:[#allocation2 + $0x30] sm:$0xff]
    %v196 = vld [vmem:[#allocation2 + $0x38] sm:$0xff]
    %v197 = vld [vmem:[#allocation2 + $0x40] sm:$0xff]
    %v198 = vld [vmem:[#allocation2 + $0x48] sm:$0x1]
    %v199 = vlaneseq
    %v200 = vshrl.u32 %v199, 7
    %v201 = vsub.s32 0, %v200
    %v202 = vrot.slane %v198, %v201
    %vm203 = vcmask 261120
    %v205 = vsel %vm203, %v193, 0
    %207 = vmatprep.subr.mxu0 0.0
    %208 = vmatpush1.msra.mxu0 0.0
    %209 = vmatprep.subr.mxu0 0.0
    %210 = vmatpush1.msra.mxu0 0.0
    %211 = vmatprep.subr.mxu0 0.0
    %212 = vmatpush1.msra.mxu0 0.0
    %213 = vmatprep.subr.mxu0 0.0
    %214 = vmatpush1.msra.mxu0 0.0
    %215 = vmatprep.subr.mxu0 0.0
    %216 = vmatpush1.msra.mxu0 0.0
    %217 = vmatprep.subr.mxu0 0.0
    %218 = vmatpush1.msra.mxu0 0.0
    %219 = vmatprep.subr.mxu0 0.0
    %220 = vmatpush1.msra.mxu0 0.0
    %221 = vmatprep.subr.mxu0 0.0
    %222 = vmatpush1.msra.mxu0 0.0
    %223 = vmatprep.subr.mxu0 0.0
    %224 = vmatpush1.msra.mxu0 0.0
    %225 = vmatprep.subr.mxu0 0.0
    %226 = vmatpush1.msra.mxu0 0.0
    %227 = vmatprep.subr.mxu0 0.0
    %228 = vmatpush1.msra.mxu0 0.0
    %229 = vmatprep.subr.mxu0 0.0
    %230 = vmatpush1.msra.mxu0 0.0
    %231 = vmatprep.subr.mxu0 0.0
    %232 = vmatpush1.msra.mxu0 %v197
    %233 = vmatprep.subr.mxu0 0.0
    %234 = vmatpush1.msra.mxu0 %v196
    %235 = vmatprep.subr.mxu0 0.0
    %236 = vmatpush1.msra.mxu0 %v195
    %237 = vmatprep.subr.mxu0 0.0
    %238 = vmatpush1.msra.mxu0 %v194
    %239 = vmatprep.subr.mxu0 0.0
    %240 = vmatpush2.msra.mxu0 0.0
    %241 = vmatprep.subr.mxu0 0.0
    %242 = vmatpush2.msra.mxu0 0.0
    %243 = vmatprep.subr.mxu0 0.0
    %244 = vmatpush2.msra.mxu0 0.0
    %245 = vmatprep.subr.mxu0 0.0
    %246 = vmatpush2.msra.mxu0 0.0
    %247 = vmatprep.subr.mxu0 0.0
    %248 = vmatpush2.msra.mxu0 0.0
    %249 = vmatprep.subr.mxu0 0.0
    %250 = vmatpush2.msra.mxu0 0.0
    %251 = vmatprep.subr.mxu0 0.0
    %252 = vmatpush2.msra.mxu0 0.0
    %253 = vmatprep.subr.mxu0 0.0
    %254 = vmatpush2.msra.mxu0 0.0
    %255 = vmatprep.subr.mxu0 0.0
    %256 = vmatpush2.msra.mxu0 0.0
    %257 = vmatprep.subr.mxu0 0.0
    %258 = vmatpush2.msra.mxu0 0.0
    %259 = vmatprep.subr.mxu0 0.0
    %260 = vmatpush2.msra.mxu0 0.0
    %261 = vmatprep.subr.mxu0 0.0
    %262 = vmatpush2.msra.mxu0 0.0
    %263 = vmatprep.subr.mxu0 0.0
    %264 = vmatpush2.msra.mxu0 0.0
    %265 = vmatprep.subr.mxu0 0.0
    %266 = vmatpush2.msra.mxu0 0.0
    %267 = vmatprep.subr.mxu0 0.0
    %268 = vmatpush2.msra.mxu0 0.0
    %269 = vmatprep.subr.mxu0 0.0
    %270 = vmatpush2.msra.mxu0 0.0
    %271 = vmatprep.mubr.f32.mxu0 0.0
    %272 = vmatmul.mubr.f32.gmra.mxu0 %v205
    %v273 = vpop.f32.mrf.mxu0
    %v274 = vadd.f32 %v202, %v273
    %v275 = vpop.f32.mrf.mxu0
    %276 = vdwg.mxu0
    %v277 = vtanh.pop %v274
    %v278 = vld [vmem:[#allocation2 + $0x50] sm:$0xff]
    %v279 = vld [vmem:[#allocation2 + $0x58] sm:$0xff]
    %v280 = vld [vmem:[#allocation2 + $0x60] sm:$0x1]
    %v281 = vlaneseq
    %v282 = vshrl.u32 %v281, 7
    %v283 = vsub.s32 0, %v282
    %v284 = vrot.slane %v280, %v283
    %v286 = vsel %vm119, %v277, 0
    %288 = vmatprep.subr.mxu0 0.0
    %289 = vmatpush1.msra.mxu0 0.0
    %290 = vmatprep.subr.mxu0 0.0
    %291 = vmatpush1.msra.mxu0 0.0
    %292 = vmatprep.subr.mxu0 0.0
    %293 = vmatpush1.msra.mxu0 0.0
    %294 = vmatprep.subr.mxu0 0.0
    %295 = vmatpush1.msra.mxu0 0.0
    %296 = vmatprep.subr.mxu0 0.0
    %297 = vmatpush1.msra.mxu0 0.0
    %298 = vmatprep.subr.mxu0 0.0
    %299 = vmatpush1.msra.mxu0 0.0
    %300 = vmatprep.subr.mxu0 0.0
    %301 = vmatpush1.msra.mxu0 0.0
    %302 = vmatprep.subr.mxu0 0.0
    %303 = vmatpush1.msra.mxu0 0.0
    %304 = vmatprep.subr.mxu0 0.0
    %305 = vmatpush1.msra.mxu0 0.0
    %306 = vmatprep.subr.mxu0 0.0
    %307 = vmatpush1.msra.mxu0 0.0
    %308 = vmatprep.subr.mxu0 0.0
    %309 = vmatpush1.msra.mxu0 0.0
    %310 = vmatprep.subr.mxu0 0.0
    %311 = vmatpush1.msra.mxu0 0.0
    %312 = vmatprep.subr.mxu0 0.0
    %313 = vmatpush1.msra.mxu0 0.0
    %314 = vmatprep.subr.mxu0 0.0
    %315 = vmatpush1.msra.mxu0 0.0
    %316 = vmatprep.subr.mxu0 0.0
    %317 = vmatpush1.msra.mxu0 %v279
    %318 = vmatprep.subr.mxu0 0.0
    %319 = vmatpush1.msra.mxu0 %v278
    %320 = vmatprep.subr.mxu0 0.0
    %321 = vmatpush2.msra.mxu0 0.0
    %322 = vmatprep.subr.mxu0 0.0
    %323 = vmatpush2.msra.mxu0 0.0
    %324 = vmatprep.subr.mxu0 0.0
    %325 = vmatpush2.msra.mxu0 0.0
    %326 = vmatprep.subr.mxu0 0.0
    %327 = vmatpush2.msra.mxu0 0.0
    %328 = vmatprep.subr.mxu0 0.0
    %329 = vmatpush2.msra.mxu0 0.0
    %330 = vmatprep.subr.mxu0 0.0
    %331 = vmatpush2.msra.mxu0 0.0
    %332 = vmatprep.subr.mxu0 0.0
    %333 = vmatpush2.msra.mxu0 0.0
    %334 = vmatprep.subr.mxu0 0.0
    %335 = vmatpush2.msra.mxu0 0.0
    %336 = vmatprep.subr.mxu0 0.0
    %337 = vmatpush2.msra.mxu0 0.0
    %338 = vmatprep.subr.mxu0 0.0
    %339 = vmatpush2.msra.mxu0 0.0
    %340 = vmatprep.subr.mxu0 0.0
    %341 = vmatpush2.msra.mxu0 0.0
    %342 = vmatprep.subr.mxu0 0.0
    %343 = vmatpush2.msra.mxu0 0.0
    %344 = vmatprep.subr.mxu0 0.0
    %345 = vmatpush2.msra.mxu0 0.0
    %346 = vmatprep.subr.mxu0 0.0
    %347 = vmatpush2.msra.mxu0 0.0
    %348 = vmatprep.subr.mxu0 0.0
    %349 = vmatpush2.msra.mxu0 0.0
    %350 = vmatprep.subr.mxu0 0.0
    %351 = vmatpush2.msra.mxu0 0.0
    %352 = vmatprep.mubr.f32.mxu0 0.0
    %353 = vmatmul.mubr.f32.gmra.mxu0 %v286
    %v354 = vpop.f32.mrf.mxu0
    %v355 = vadd.f32 %v284, %v354
    %v356 = vpop.f32.mrf.mxu0
    %357 = vdwg.mxu0
    %v358 = vlaneseq
    %v359 = vand.u32 %v358, 127
    %vm360 = vcmp.lt.s32.totalorder %v359, 2
    %v361 = vsel %vm360, %v355, -1e+30
    %362 = vmax.xlane.f32.xlu0 %v361
    %v363 = vpop.xlane.xlu0 %362
    %v364 = vsub.f32 %v361, %v363
    %v365 = vmul.f32 %v364, 1.442695
    %v366 = vpow.pop %v365
    %367 = vadd.xlane.f32.xlu0 %v366
    %v368 = vpop.xlane.xlu0 %367
    %v369 = vrcp.pop %v368
    %v370 = vmul.f32 %v366, %v369
    %371 = vst [vmem:[#allocation5] sm:$0xff] %v370
    // Predicated region
    $region14: #{tpu_custom_call.1} parent=1 // pred_check
      _
    $region15: #{tpu_custom_call.1} parent=1 // pred_check_branch
      %373 = sbr.rel (0) target = $region17
    $region16: #{tpu_custom_call.1} parent=1 // pred_region
      %s375 = ssub.s32 128, 128
      %376 = vsyncadd [#allocation4], %s375
      %s378 = sshll.u32 [#allocation5], 4
      %s379 = int_to_ptr.vmem [resolvable:$true] %s378
      %381 = dma.vmem_to_hbm [thread:$0]  %s379, 128, %s2, [#allocation4]
    $region17: #{tpu_custom_call.1} parent=1 // pred_fallthru
      _
    // Predicated region
    $region18: #{tpu_custom_call.1} parent=1 // pred_check
      _
    $region19: #{tpu_custom_call.1} parent=1 // pred_check_branch
      %383 = sbr.rel (0) target = $region21
    $region20: #{tpu_custom_call.1} parent=1 // pred_region
      %384 = dma.done [#allocation4], 128
    $region21: #{tpu_custom_call.1} parent=1 // pred_fallthru
      _
    %385 = vsyncpa [#allocation3], 1
    %386 = vsyncpa [#allocation4], 1

</llo_original>
